<compile_context>
chip_gen: v7x
topology: tpu7x:2x2x1
jax: 0.10.0
libtpu: 0.0.40
codegen_flags: <defaults>
</compile_context>

<pallas_src>
import jax
import jax.numpy as jnp
from jax.experimental import pallas as pl
from jax.experimental.pallas import tpu as pltpu


def attention_kernel(x_ref, w1b_ref, b1b_ref, w2b_ref, exp_ref, o_ref):
    # x_ref  : (Bt, S*F)   streamed tile, native dtype, lane dense
    # w1b_ref: (S*F, S*A)  blockdiag_S(W1)            (resident)
    # b1b_ref: (1, S*A)    b1 tiled S times            (resident)
    # w2b_ref: (S*A, S)    blockdiag_S(w2)             (resident)
    # exp_ref: (S, S*F)    0/1 expansion matrix        (resident)
    # o_ref  : (Bt, S*F)

    # ---- token scores, all in the flat lane-dense layout -------------------
    # (Bt, S*F) @ (S*F, S*A) -> (Bt, S*A): column block s == x[:, s, :] @ W1.
    h = jnp.tanh(
        jnp.dot(x_ref[...], w1b_ref[...], preferred_element_type=jnp.float32)
        + b1b_ref[...])                                     # (Bt, S*A), f32
    # (Bt, S*A) @ (S*A, S) -> (Bt, S): column s == h[:, s*A:(s+1)*A] @ w2.
    s = jnp.dot(h, w2b_ref[...], preferred_element_type=jnp.float32)
    # b2 omitted: a uniform shift of the scores cancels under softmax.

    # ---- softmax over the sequence axis (the lane axis of `s`) -------------
    m = jnp.max(s, axis=1, keepdims=True)                   # (Bt, 1)
    e = jnp.exp(s - m)                                      # (Bt, S)
    denom = jnp.sum(e, axis=1, keepdims=True)               # (Bt, 1)
    probs = e * (1.0 / denom)                               # exact; tiny tensor

    # ---- broadcast (Bt, S) -> (Bt, S*F) without any relayout ---------------
    w_dense = jnp.dot(probs, exp_ref[...],
                      preferred_element_type=jnp.float32)   # (Bt, S*F)

    # ---- weighted features (x re-read here: short live range) --------------
    o_ref[...] = (x_ref[...] * w_dense).astype(o_ref.dtype)


def _tile_budget_bytes(bt, S, F, A, itemsize):
    """Rough VMEM working-set estimate for one grid step."""
    stream = 2 * 2 * bt * S * F * itemsize                  # in + out, double buffered
    interm = bt * (S * A + S * F + 4 * S) * 4               # H, w_dense, scores (f32)
    consts = 2 * ((S * F) * (S * A) * itemsize              # blockdiag W1
                  + (S * A) * S * 4                         # blockdiag w2
                  + S * (S * F) * 4                          # expansion matrix
                  + S * A * 4)                               # tiled b1
    return stream + interm + consts + (2 << 20)             # +2 MiB slack


def _pick_batch_tile(B, S, F, A, itemsize, vmem_limit, target_bytes=4 << 20):
    """Batch tile: ~4 MiB, 8-row aligned, >=2 grid steps when possible."""
    per_batch = max(1, S * F * itemsize)
    bt = int(min(B, max(1, target_bytes // per_batch)))
    # Lane-dense 2-D blocks need the sublane (batch) dim to be a multiple of
    # 8 unless the block spans the whole batch.
    if bt >= 8:
        bt = (bt // 8) * 8
    elif B <= 8:
        bt = B
    else:
        bt = 8
    # v7x megacore: keep >= 2 grid steps so the "parallel" batch axis can be
    # sharded across both TensorCores (no effect on single-core v5e/v6e).
    if B >= 16 and bt > (B + 1) // 2:
        bt = max(8, (((B + 1) // 2) // 8) * 8)
    # Shrink until the working set fits the VMEM budget.
    while bt > 8 and _tile_budget_bytes(bt, S, F, A, itemsize) > vmem_limit:
        bt = max(8, ((bt // 2 + 7) // 8) * 8)
    if _tile_budget_bytes(bt, S, F, A, itemsize) > vmem_limit:
        # TODO(synk): add an S-tiled online-softmax path for very large S*F
        # (a single (Bt, S*F) slab + block-diag constants no longer fit VMEM).
        raise ValueError("Attention tile does not fit the VMEM budget; "
                         "reduce S*F or raise vmem_limit_bytes.")
    return int(bt)


def attention_forward(x, w1, b1, w2, b2=None, *,
                      batch_tile=None, vmem_limit_bytes=48 * 1024 * 1024):
    B, S, F = x.shape
    A = w1.shape[1]
    # b2 accepted for API parity with nn.Linear(A, 1); softmax over the
    # sequence axis is shift invariant, so adding it is mathematically a no-op.
    del b2

    xdt = x.dtype
    itemsize = jnp.dtype(xdt).itemsize
    f32 = jnp.float32
    eye = jnp.eye(S, dtype=f32)

    # blockdiag_S(W1): (S*F, S*A), block (s, s) == W1.
    w1_big = (jnp.einsum("st,fa->sfta", eye, w1.astype(f32))
              .reshape(S * F, S * A).astype(xdt))
    # tile_S(b1): (1, S*A)
    b1_big = jnp.tile(jnp.reshape(b1, (1, A)).astype(f32), (1, S))
    # blockdiag_S(w2): (S*A, S), column s holds w2 in rows [s*A, (s+1)*A).
    w2_big = (jnp.einsum("ts,a->tas", eye, jnp.reshape(w2, (A,)).astype(f32))
              .reshape(S * A, S))
    # 0/1 expansion matrix: (probs @ expand)[b, s*F + f] == probs[b, s].
    expand = jnp.repeat(eye, F, axis=1)                      # (S, S*F)

    if batch_tile is None:
        batch_tile = _pick_batch_tile(B, S, F, A, itemsize, vmem_limit_bytes)
    Bt = int(batch_tile)
    assert Bt == B or Bt % 8 == 0, (
        "batch tile must be a multiple of 8 (sublane alignment of the "
        "lane-dense 2-D block) or cover the whole batch")

    x2d = x.reshape(B, S * F)                                # free row-major view
    grid = (pl.cdiv(B, Bt),)                                 # ragged last tile OK

    out2d = pl.pallas_call(
        attention_kernel,
        out_shape=jax.ShapeDtypeStruct((B, S * F), xdt),
        grid_spec=pltpu.PrefetchScalarGridSpec(
            num_scalar_prefetch=0,
            grid=grid,
            in_specs=[
                pl.BlockSpec((Bt, S * F), lambda i: (i, 0)),      # x (streamed, lane dense)
                pl.BlockSpec((S * F, S * A), lambda i: (0, 0)),   # blockdiag W1 (resident)
                pl.BlockSpec((1, S * A), lambda i: (0, 0)),       # tiled b1
                pl.BlockSpec((S * A, S), lambda i: (0, 0)),       # blockdiag w2
                pl.BlockSpec((S, S * F), lambda i: (0, 0)),       # expansion matrix
            ],
            out_specs=pl.BlockSpec((Bt, S * F), lambda i: (i, 0)),
        ),
        compiler_params=pltpu.CompilerParams(
            dimension_semantics=("parallel",),
            vmem_limit_bytes=vmem_limit_bytes,
        ),
    )(x2d, w1_big, b1_big, w2_big, expand)

    return out2d.reshape(B, S, F)


def reference_forward(x, w1, b1, w2, b2):
    # Pure-JAX reference matching the PyTorch module semantics exactly.
    hp = jax.lax.Precision.HIGHEST
    h = jnp.tanh(jnp.einsum("bsf,fa->bsa", x, w1, precision=hp) + b1)   # (B, S, A)
    s = jnp.einsum("bsa,ao->bso", h, w2, precision=hp) + b2             # (B, S, 1)
    w = jax.nn.softmax(s, axis=1)                                        # softmax over seq
    return x * w


if __name__ == "__main__":
    key = jax.random.PRNGKey(0)
    B, S, feature_dim, attention_dim = 2, 8, 32, 16

    kx, k1, k2, k3, k4 = jax.random.split(key, 5)
    x = jax.random.normal(kx, (B, S, feature_dim), dtype=jnp.float32)

    # Parameter shapes match nn.Linear(F, A) and nn.Linear(A, 1).
    w1 = jax.random.normal(k1, (feature_dim, attention_dim), dtype=jnp.float32) * 0.1
    b1 = jax.random.normal(k2, (attention_dim,), dtype=jnp.float32) * 0.1
    w2 = jax.random.normal(k3, (attention_dim, 1), dtype=jnp.float32) * 0.1
    b2 = jax.random.normal(k4, (1,), dtype=jnp.float32) * 0.1

    out = attention_forward(x, w1, b1, w2, b2)
    out = jax.block_until_ready(out)

    ref = reference_forward(x, w1, b1, w2, b2)
    assert out.shape == (B, S, feature_dim)
    assert jnp.allclose(out, ref, atol=2e-3, rtol=2e-3), "mismatch vs reference"

    print("KERNEL_OK")
</pallas_src>

<mosaic_0001>
module attributes {stable_mosaic.version = 11 : i64} {
  func.func @attention_kernel(%arg0: i32, %arg1: memref<2x256xf32, #tpu.memory_space<vmem>>, %arg2: memref<256x128xf32, #tpu.memory_space<vmem>>, %arg3: memref<1x128xf32, #tpu.memory_space<vmem>>, %arg4: memref<128x8xf32, #tpu.memory_space<vmem>>, %arg5: memref<8x256xf32, #tpu.memory_space<vmem>>, %arg6: memref<2x256xf32, #tpu.memory_space<vmem>>) attributes {dimension_semantics = [#tpu.dimension_semantics<parallel>], iteration_bounds = array<i64: 1>, scalar_prefetch = 0 : i64, scratch_operands = 0 : i64, tpu.core_type = #tpu.core_type<tc>, window_params = [{transform_indices = @transform_0, window_bounds = array<i64: 2, 256>}, {pipeline_mode = #tpu.pipeline_mode<synchronous>, transform_indices = @transform_1, window_bounds = array<i64: 256, 128>}, {pipeline_mode = #tpu.pipeline_mode<synchronous>, transform_indices = @transform_2, window_bounds = array<i64: 1, 128>}, {pipeline_mode = #tpu.pipeline_mode<synchronous>, transform_indices = @transform_3, window_bounds = array<i64: 128, 8>}, {pipeline_mode = #tpu.pipeline_mode<synchronous>, transform_indices = @transform_4, window_bounds = array<i64: 8, 256>}, {transform_indices = @transform_5, window_bounds = array<i64: 2, 256>}]} {
    %c0 = arith.constant 0 : index
    %c0_0 = arith.constant 0 : index
    %0 = vector.load %arg1[%c0, %c0_0] : memref<2x256xf32, #tpu.memory_space<vmem>>, vector<2x256xf32>
    %c0_1 = arith.constant 0 : index
    %c0_2 = arith.constant 0 : index
    %1 = vector.load %arg2[%c0_1, %c0_2] : memref<256x128xf32, #tpu.memory_space<vmem>>, vector<256x128xf32>
    %cst = arith.constant dense<0.000000e+00> : vector<2x128xf32>
    %2 = tpu.matmul %0, %1, %cst {dimension_numbers = #tpu.dot_dimension_numbers<[1], [0], [0], [1], [0, 0, 1, 1], [], []>} : vector<2x256xf32>, vector<256x128xf32>, vector<2x128xf32> -> vector<2x128xf32>
    %c0_3 = arith.constant 0 : index
    %c0_4 = arith.constant 0 : index
    %3 = vector.load %arg3[%c0_3, %c0_4] : memref<1x128xf32, #tpu.memory_space<vmem>>, vector<1x128xf32>
    %4 = vector.broadcast %3 : vector<1x128xf32> to vector<2x128xf32>
    %5 = arith.addf %2, %4 : vector<2x128xf32>
    %6 = math.tanh %5 : vector<2x128xf32>
    %c0_5 = arith.constant 0 : index
    %c0_6 = arith.constant 0 : index
    %7 = vector.load %arg4[%c0_5, %c0_6] : memref<128x8xf32, #tpu.memory_space<vmem>>, vector<128x8xf32>
    %cst_7 = arith.constant dense<0.000000e+00> : vector<2x8xf32>
    %8 = tpu.matmul %6, %7, %cst_7 {dimension_numbers = #tpu.dot_dimension_numbers<[1], [0], [0], [1], [0, 0, 1, 1], [], []>} : vector<2x128xf32>, vector<128x8xf32>, vector<2x8xf32> -> vector<2x8xf32>
    %cst_8 = arith.constant dense<0xFF800000> : vector<2xf32>
    %9 = vector.multi_reduction <maximumf>, %8, %cst_8 [1] : vector<2x8xf32> to vector<2xf32>
    %10 = vector.shape_cast %9 : vector<2xf32> to vector<2x1xf32>
    %11 = vector.broadcast %10 : vector<2x1xf32> to vector<2x8xf32>
    %12 = arith.subf %8, %11 : vector<2x8xf32>
    %13 = math.exp %12 : vector<2x8xf32>
    %cst_9 = arith.constant dense<0.000000e+00> : vector<2xf32>
    %14 = vector.multi_reduction <add>, %13, %cst_9 [1] : vector<2x8xf32> to vector<2xf32>
    %15 = vector.shape_cast %14 : vector<2xf32> to vector<2x1xf32>
    %cst_10 = arith.constant 1.000000e+00 : f32
    %16 = vector.broadcast %cst_10 : f32 to vector<2x1xf32>
    %17 = arith.divf %16, %15 : vector<2x1xf32>
    %18 = vector.broadcast %17 : vector<2x1xf32> to vector<2x8xf32>
    %19 = arith.mulf %13, %18 : vector<2x8xf32>
    %c0_11 = arith.constant 0 : index
    %c0_12 = arith.constant 0 : index
    %20 = vector.load %arg5[%c0_11, %c0_12] : memref<8x256xf32, #tpu.memory_space<vmem>>, vector<8x256xf32>
    %cst_13 = arith.constant dense<0.000000e+00> : vector<2x256xf32>
    %21 = tpu.matmul %19, %20, %cst_13 {dimension_numbers = #tpu.dot_dimension_numbers<[1], [0], [0], [1], [0, 0, 1, 1], [], []>} : vector<2x8xf32>, vector<8x256xf32>, vector<2x256xf32> -> vector<2x256xf32>
    %c0_14 = arith.constant 0 : index
    %c0_15 = arith.constant 0 : index
    %22 = vector.load %arg1[%c0_14, %c0_15] : memref<2x256xf32, #tpu.memory_space<vmem>>, vector<2x256xf32>
    %23 = arith.mulf %22, %21 : vector<2x256xf32>
    %c0_16 = arith.constant 0 : index
    %c0_17 = arith.constant 0 : index
    %24 = vector.load %arg6[%c0_16, %c0_17] : memref<2x256xf32, #tpu.memory_space<vmem>>, vector<2x256xf32>
    tpu.vector_store %arg6[%c0_16, %c0_17], %23 {strides = array<i32>} : memref<2x256xf32, #tpu.memory_space<vmem>>, vector<2x256xf32>,
    return
  }
  func.func @transform_0(%arg0: i32) -> (i32, i32) {
    %c0_i32 = arith.constant 0 : i32
    %c0_i32_0 = arith.constant 0 : i32
    return %arg0, %c0_i32 : i32, i32
  }
  func.func @transform_1(%arg0: i32) -> (i32, i32) {
    %c0_i32 = arith.constant 0 : i32
    %c0_i32_0 = arith.constant 0 : i32
    %c0_i32_1 = arith.constant 0 : i32
    return %c0_i32, %c0_i32_0 : i32, i32
  }
  func.func @transform_2(%arg0: i32) -> (i32, i32) {
    %c0_i32 = arith.constant 0 : i32
    %c0_i32_0 = arith.constant 0 : i32
    %c0_i32_1 = arith.constant 0 : i32
    return %c0_i32, %c0_i32_0 : i32, i32
  }
  func.func @transform_3(%arg0: i32) -> (i32, i32) {
    %c0_i32 = arith.constant 0 : i32
    %c0_i32_0 = arith.constant 0 : i32
    %c0_i32_1 = arith.constant 0 : i32
    return %c0_i32, %c0_i32_0 : i32, i32
  }
  func.func @transform_4(%arg0: i32) -> (i32, i32) {
    %c0_i32 = arith.constant 0 : i32
    %c0_i32_0 = arith.constant 0 : i32
    %c0_i32_1 = arith.constant 0 : i32
    return %c0_i32, %c0_i32_0 : i32, i32
  }
  func.func @transform_5(%arg0: i32) -> (i32, i32) {
    %c0_i32 = arith.constant 0 : i32
    %c0_i32_0 = arith.constant 0 : i32
    return %arg0, %c0_i32 : i32, i32
  }
}

</mosaic_0001>

<llo_original>
// kernel: tpu_custom_call.1
$region0: #{tpu_custom_call.1}
  #allocation0 [shape = 'u32[]', space=smem, size = 0x4, offset = 0x4, fixed_abs, tag = 'smem constant byte address 0x4 - core index']
  #allocation1 [shape = 'u32[144,128]{1,0:T(1,128)}', space=vmem, size = 0x12000, scoped, tag = 'internal scratch']
  %s0 = inlined_call_operand.vmem [shape: f32[2,256], index: 0, kind: input, shape index: {}]
  %s1 = inlined_call_operand.hbm [shape: f32[256,128], index: 1, kind: input, shape index: {}]
  %s2 = inlined_call_operand.vmem [shape: f32[1,128], index: 2, kind: input, shape index: {}]
  %s3 = inlined_call_operand.vmem [shape: f32[128,8], index: 3, kind: input, shape index: {}]
  %s4 = inlined_call_operand.vmem [shape: f32[8,256], index: 4, kind: input, shape index: {}]
  %s5 = inlined_call_operand.hbm [shape: f32[2,256], index: 5, kind: output, shape index: {}]
  %s6 = sld [smem:[#allocation0]]
  $region34: #{tpu_custom_call.1} parent=0
    _
  %s8 = ssub.s32 1, %s6
  %s9 = scalar_select 0, %s8, %s6
  $region1: #{tpu_custom_call.1} parent=0
    #allocation2 [shape = 'u8[131072]{0}', space=vmem, size = 0x20000, scoped, tag = 'input window, operand 1, single buffered']
    #allocation3 [shape = 's32[1]{0}', space=sflag, size = 0x4, scoped, tag = 'scoped memory for tpu_custom_call.1']
    #allocation4 [shape = 's32[1]{0}', space=sflag, size = 0x4, scoped, tag = 'scoped memory for tpu_custom_call.1']
    #allocation5 [shape = 'u8[2048]{0}', space=vmem, size = 0x800, scoped, tag = 'output window, operand 0, single buffered']
    %10 = vsyncpa [#allocation3], 0
    %11 = vsyncpa [#allocation4], 0
    // Predicated region
    $region2: #{tpu_custom_call.1} parent=1 // pred_check
      _
    $region3: #{tpu_custom_call.1} parent=1 // pred_check_branch
      %13 = sbr.rel (0) target = $region5
    $region4: #{tpu_custom_call.1} parent=1 // pred_region
      _
    $region5: #{tpu_custom_call.1} parent=1 // pred_fallthru
      _
    // Predicated region
    $region6: #{tpu_custom_call.1} parent=1 // pred_check
      _
    $region7: #{tpu_custom_call.1} parent=1 // pred_check_branch
      %15 = sbr.rel (0) target = $region9
    $region8: #{tpu_custom_call.1} parent=1 // pred_region
      %s17 = ssub.s32 4096, 4096
      %18 = vsyncadd [#allocation3], %s17
      %s19 = sshll.u32 [#allocation2], 4
      %s20 = int_to_ptr.vmem [resolvable:$true] %s19
      %25 = dma.hbm_to_vmem [thread:$0]  %s1, 4096, %s20, [#allocation3], 128, 128, 8
    $region9: #{tpu_custom_call.1} parent=1 // pred_fallthru
      _
    // Predicated region
    $region10: #{tpu_custom_call.1} parent=1 // pred_check
      _
    $region11: #{tpu_custom_call.1} parent=1 // pred_check_branch
      %27 = sbr.rel (0) target = $region13
    $region12: #{tpu_custom_call.1} parent=1 // pred_region
      _
    $region13: #{tpu_custom_call.1} parent=1 // pred_fallthru
      _
    // Predicated region
    $region14: #{tpu_custom_call.1} parent=1 // pred_check
      _
    $region15: #{tpu_custom_call.1} parent=1 // pred_check_branch
      %29 = sbr.rel (0) target = $region17
    $region16: #{tpu_custom_call.1} parent=1 // pred_region
      _
    $region17: #{tpu_custom_call.1} parent=1 // pred_fallthru
      _
    // Predicated region
    $region18: #{tpu_custom_call.1} parent=1 // pred_check
      _
    $region19: #{tpu_custom_call.1} parent=1 // pred_check_branch
      %31 = sbr.rel (0) target = $region21
    $region20: #{tpu_custom_call.1} parent=1 // pred_region
      _
    $region21: #{tpu_custom_call.1} parent=1 // pred_fallthru
      _
    // Predicated region
    $region22: #{tpu_custom_call.1} parent=1 // pred_check
      _
    $region23: #{tpu_custom_call.1} parent=1 // pred_check_branch
      %33 = sbr.rel (0) target = $region25
    $region24: #{tpu_custom_call.1} parent=1 // pred_region
      %34 = dma.done [#allocation3], 4096
    $region25: #{tpu_custom_call.1} parent=1 // pred_fallthru
      _
    %v35 = vld [vmem:[%s0] sm:$0xf]
    %v36 = vld [vmem:[#allocation2] sm:$0xff]
    %v37 = vld [vmem:[#allocation2 + $0x8] sm:$0xff]
    %v38 = vld [vmem:[#allocation2 + $0x10] sm:$0xff]
    %v39 = vld [vmem:[#allocation2 + $0x18] sm:$0xff]
    %v40 = vld [vmem:[#allocation2 + $0x20] sm:$0xff]
    %v41 = vld [vmem:[#allocation2 + $0x28] sm:$0xff]
    %v42 = vld [vmem:[#allocation2 + $0x30] sm:$0xff]
    %v43 = vld [vmem:[#allocation2 + $0x38] sm:$0xff]
    %v44 = vld [vmem:[#allocation2 + $0x40] sm:$0xff]
    %v45 = vld [vmem:[#allocation2 + $0x48] sm:$0xff]
    %v46 = vld [vmem:[#allocation2 + $0x50] sm:$0xff]
    %v47 = vld [vmem:[#allocation2 + $0x58] sm:$0xff]
    %v48 = vld [vmem:[#allocation2 + $0x60] sm:$0xff]
    %v49 = vld [vmem:[#allocation2 + $0x68] sm:$0xff]
    %v50 = vld [vmem:[#allocation2 + $0x70] sm:$0xff]
    %v51 = vld [vmem:[#allocation2 + $0x78] sm:$0xff]
    %v52 = vld [vmem:[#allocation2 + $0x80] sm:$0xff]
    %v53 = vld [vmem:[#allocation2 + $0x88] sm:$0xff]
    %v54 = vld [vmem:[#allocation2 + $0x90] sm:$0xff]
    %v55 = vld [vmem:[#allocation2 + $0x98] sm:$0xff]
    %v56 = vld [vmem:[#allocation2 + $0xa0] sm:$0xff]
    %v57 = vld [vmem:[#allocation2 + $0xa8] sm:$0xff]
    %v58 = vld [vmem:[#allocation2 + $0xb0] sm:$0xff]
    %v59 = vld [vmem:[#allocation2 + $0xb8] sm:$0xff]
    %v60 = vld [vmem:[#allocation2 + $0xc0] sm:$0xff]
    %v61 = vld [vmem:[#allocation2 + $0xc8] sm:$0xff]
    %v62 = vld [vmem:[#allocation2 + $0xd0] sm:$0xff]
    %v63 = vld [vmem:[#allocation2 + $0xd8] sm:$0xff]
    %v64 = vld [vmem:[#allocation2 + $0xe0] sm:$0xff]
    %v65 = vld [vmem:[#allocation2 + $0xe8] sm:$0xff]
    %v66 = vld [vmem:[#allocation2 + $0xf0] sm:$0xff]
    %v67 = vld [vmem:[#allocation2 + $0xf8] sm:$0xff]
    %v68 = vld [vmem:[%s2] sm:$0x1]
    %v70 = vlaneseq
    %v71 = vshrl.u32 %v70, 7
    %v72 = vsub.s32 0, %v71
    %v73 = vrot.slane %v68, %v72
    %v77 = vunpack.c.l.s4 1983009808
    %v78 = vunpack.c.0.s8 %v77
    %v79 = vlaneseq
    %v80 = vshrl.u32 %v79, 7
    %v81 = vsub.s32 %v78, %v80
    %v82 = vrot.slane %v35, %v81
    %v83 = vcombine.high %v82, %v82
    %86 = vmatprep.subr.mxu0 0.0
    %87 = vmatpush1.msra.mxu0 %v36
    %88 = vmatprep.subr.mxu0 0.0
    %89 = vmatpush1.msra.mxu0 %v37
    %90 = vmatprep.subr.mxu0 0.0
    %91 = vmatpush1.msra.mxu0 %v38
    %92 = vmatprep.subr.mxu0 0.0
    %93 = vmatpush1.msra.mxu0 %v39
    %94 = vmatprep.subr.mxu0 0.0
    %95 = vmatpush1.msra.mxu0 %v40
    %96 = vmatprep.subr.mxu0 0.0
    %97 = vmatpush1.msra.mxu0 %v41
    %98 = vmatprep.subr.mxu0 0.0
    %99 = vmatpush1.msra.mxu0 %v42
    %100 = vmatprep.subr.mxu0 0.0
    %101 = vmatpush1.msra.mxu0 %v43
    %102 = vmatprep.subr.mxu0 0.0
    %103 = vmatpush1.msra.mxu0 %v44
    %104 = vmatprep.subr.mxu0 0.0
    %105 = vmatpush1.msra.mxu0 %v45
    %106 = vmatprep.subr.mxu0 0.0
    %107 = vmatpush1.msra.mxu0 %v46
    %108 = vmatprep.subr.mxu0 0.0
    %109 = vmatpush1.msra.mxu0 %v47
    %110 = vmatprep.subr.mxu0 0.0
    %111 = vmatpush1.msra.mxu0 %v48
    %112 = vmatprep.subr.mxu0 0.0
    %113 = vmatpush1.msra.mxu0 %v49
    %114 = vmatprep.subr.mxu0 0.0
    %115 = vmatpush1.msra.mxu0 %v50
    %116 = vmatprep.subr.mxu0 0.0
    %117 = vmatpush1.msra.mxu0 %v51
    %118 = vmatprep.subr.mxu0 0.0
    %119 = vmatpush1.msra.mxu0 %v52
    %120 = vmatprep.subr.mxu0 0.0
    %121 = vmatpush1.msra.mxu0 %v53
    %122 = vmatprep.subr.mxu0 0.0
    %123 = vmatpush1.msra.mxu0 %v54
    %124 = vmatprep.subr.mxu0 0.0
    %125 = vmatpush1.msra.mxu0 %v55
    %126 = vmatprep.subr.mxu0 0.0
    %127 = vmatpush1.msra.mxu0 %v56
    %128 = vmatprep.subr.mxu0 0.0
    %129 = vmatpush1.msra.mxu0 %v57
    %130 = vmatprep.subr.mxu0 0.0
    %131 = vmatpush1.msra.mxu0 %v58
    %132 = vmatprep.subr.mxu0 0.0
    %133 = vmatpush1.msra.mxu0 %v59
    %134 = vmatprep.subr.mxu0 0.0
    %135 = vmatpush1.msra.mxu0 %v60
    %136 = vmatprep.subr.mxu0 0.0
    %137 = vmatpush1.msra.mxu0 %v61
    %138 = vmatprep.subr.mxu0 0.0
    %139 = vmatpush1.msra.mxu0 %v62
    %140 = vmatprep.subr.mxu0 0.0
    %141 = vmatpush1.msra.mxu0 %v63
    %142 = vmatprep.subr.mxu0 0.0
    %143 = vmatpush1.msra.mxu0 %v64
    %144 = vmatprep.subr.mxu0 0.0
    %145 = vmatpush1.msra.mxu0 %v65
    %146 = vmatprep.subr.mxu0 0.0
    %147 = vmatpush1.msra.mxu0 %v66
    %148 = vmatprep.subr.mxu0 0.0
    %149 = vmatpush1.msra.mxu0 %v67
    %150 = vmatprep.mubr.f32.mxu0 %v83
    %151 = vmatmul.mubr.f32.gmra.mrb[0].mxu0 %v82
    %v152 = vpop.f32.mrb[0].mxu0
    %v153 = vadd.f32 %v73, %v152
    %v154 = vpop.f32.mrb[0].mxu0
    %155 = vdwg.mxu0
    %v156 = vtanh.pop %v153
    %v157 = vld [vmem:[%s3] sm:$0xff]
    %v158 = vld [vmem:[%s3 + $0x8] sm:$0xff]
    %v159 = vld [vmem:[%s3 + $0x10] sm:$0xff]
    %v160 = vld [vmem:[%s3 + $0x18] sm:$0xff]
    %v161 = vld [vmem:[%s3 + $0x20] sm:$0xff]
    %v162 = vld [vmem:[%s3 + $0x28] sm:$0xff]
    %v163 = vld [vmem:[%s3 + $0x30] sm:$0xff]
    %v164 = vld [vmem:[%s3 + $0x38] sm:$0xff]
    %v165 = vld [vmem:[%s3 + $0x40] sm:$0xff]
    %v166 = vld [vmem:[%s3 + $0x48] sm:$0xff]
    %v167 = vld [vmem:[%s3 + $0x50] sm:$0xff]
    %v168 = vld [vmem:[%s3 + $0x58] sm:$0xff]
    %v169 = vld [vmem:[%s3 + $0x60] sm:$0xff]
    %v170 = vld [vmem:[%s3 + $0x68] sm:$0xff]
    %v171 = vld [vmem:[%s3 + $0x70] sm:$0xff]
    %v172 = vld [vmem:[%s3 + $0x78] sm:$0xff]
    %173 = vmatprep.subr.mxu0 0.0
    %174 = vmatpush1.msra.mxu0 %v157
    %175 = vmatprep.subr.mxu0 0.0
    %176 = vmatpush1.msra.mxu0 %v158
    %177 = vmatprep.subr.mxu0 0.0
    %178 = vmatpush1.msra.mxu0 %v159
    %179 = vmatprep.subr.mxu0 0.0
    %180 = vmatpush1.msra.mxu0 %v160
    %181 = vmatprep.subr.mxu0 0.0
    %182 = vmatpush1.msra.mxu0 %v161
    %183 = vmatprep.subr.mxu0 0.0
    %184 = vmatpush1.msra.mxu0 %v162
    %185 = vmatprep.subr.mxu0 0.0
    %186 = vmatpush1.msra.mxu0 %v163
    %187 = vmatprep.subr.mxu0 0.0
    %188 = vmatpush1.msra.mxu0 %v164
    %189 = vmatprep.subr.mxu0 0.0
    %190 = vmatpush1.msra.mxu0 %v165
    %191 = vmatprep.subr.mxu0 0.0
    %192 = vmatpush1.msra.mxu0 %v166
    %193 = vmatprep.subr.mxu0 0.0
    %194 = vmatpush1.msra.mxu0 %v167
    %195 = vmatprep.subr.mxu0 0.0
    %196 = vmatpush1.msra.mxu0 %v168
    %197 = vmatprep.subr.mxu0 0.0
    %198 = vmatpush1.msra.mxu0 %v169
    %199 = vmatprep.subr.mxu0 0.0
    %200 = vmatpush1.msra.mxu0 %v170
    %201 = vmatprep.subr.mxu0 0.0
    %202 = vmatpush1.msra.mxu0 %v171
    %203 = vmatprep.subr.mxu0 0.0
    %204 = vmatpush1.msra.mxu0 %v172
    %205 = vmatprep.subr.mxu0 0.0
    %206 = vmatpush1.msra.mxu0 0.0
    %207 = vmatprep.subr.mxu0 0.0
    %208 = vmatpush1.msra.mxu0 0.0
    %209 = vmatprep.subr.mxu0 0.0
    %210 = vmatpush1.msra.mxu0 0.0
    %211 = vmatprep.subr.mxu0 0.0
    %212 = vmatpush1.msra.mxu0 0.0
    %213 = vmatprep.subr.mxu0 0.0
    %214 = vmatpush1.msra.mxu0 0.0
    %215 = vmatprep.subr.mxu0 0.0
    %216 = vmatpush1.msra.mxu0 0.0
    %217 = vmatprep.subr.mxu0 0.0
    %218 = vmatpush1.msra.mxu0 0.0
    %219 = vmatprep.subr.mxu0 0.0
    %220 = vmatpush1.msra.mxu0 0.0
    %221 = vmatprep.subr.mxu0 0.0
    %222 = vmatpush1.msra.mxu0 0.0
    %223 = vmatprep.subr.mxu0 0.0
    %224 = vmatpush1.msra.mxu0 0.0
    %225 = vmatprep.subr.mxu0 0.0
    %226 = vmatpush1.msra.mxu0 0.0
    %227 = vmatprep.subr.mxu0 0.0
    %228 = vmatpush1.msra.mxu0 0.0
    %229 = vmatprep.subr.mxu0 0.0
    %230 = vmatpush1.msra.mxu0 0.0
    %231 = vmatprep.subr.mxu0 0.0
    %232 = vmatpush1.msra.mxu0 0.0
    %233 = vmatprep.subr.mxu0 0.0
    %234 = vmatpush1.msra.mxu0 0.0
    %235 = vmatprep.subr.mxu0 0.0
    %236 = vmatpush1.msra.mxu0 0.0
    %237 = vmatprep.mubr.f32.mxu0 0.0
    %238 = vmatmul.mubr.f32.gmra.mrb[0].mxu0 %v156
    %v239 = vpop.f32.mrb[0].mxu0
    %v240 = vadd.f32 0.0, %v239
    %v241 = vpop.f32.mrb[0].mxu0
    %242 = vdwg.mxu0
    %vm243 = vcmask 58368
    %v244 = vsel %vm243, %v240, -inf
    %245 = vmax.xlane.f32.xlu0 %v244
    %v246 = vpop.xlane.xlu0 %245
    %v247 = vsub.f32 %v240, %v246
    %v248 = vmul.f32 %v247, 1.442695
    %v249 = vpow.pop %v248
    %v250 = vsel %vm243, %v249, 0.0
    %251 = vadd.xlane.f32.xlu0 %v250
    %v252 = vpop.xlane.xlu0 %251
    %v253 = vrcp.pop %v252
    %v254 = vmul.f32 1.0, %v253
    %v255 = vmul.f32 %v249, %v254
    %v256 = vld [vmem:[%s4] sm:$0xff]
    %v257 = vld [vmem:[%s4 + $0x8] sm:$0xff]
    %vm258 = vcmask 64512
    %v260 = vsel %vm258, %v255, 0
    %262 = vmatprep.subr.mxu0 %v257
    %263 = vmatpush1.msra.mxu0 %v256
    %264 = vmatprep.subr.mxu0 0.0
    %265 = vmatpush1.msra.mxu0 0.0
    %266 = vmatprep.subr.mxu0 0.0
    %267 = vmatpush1.msra.mxu0 0.0
    %268 = vmatprep.subr.mxu0 0.0
    %269 = vmatpush1.msra.mxu0 0.0
    %270 = vmatprep.subr.mxu0 0.0
    %271 = vmatpush1.msra.mxu0 0.0
    %272 = vmatprep.subr.mxu0 0.0
    %273 = vmatpush1.msra.mxu0 0.0
    %274 = vmatprep.subr.mxu0 0.0
    %275 = vmatpush1.msra.mxu0 0.0
    %276 = vmatprep.subr.mxu0 0.0
    %277 = vmatpush1.msra.mxu0 0.0
    %278 = vmatprep.subr.mxu0 0.0
    %279 = vmatpush1.msra.mxu0 0.0
    %280 = vmatprep.subr.mxu0 0.0
    %281 = vmatpush1.msra.mxu0 0.0
    %282 = vmatprep.subr.mxu0 0.0
    %283 = vmatpush1.msra.mxu0 0.0
    %284 = vmatprep.subr.mxu0 0.0
    %285 = vmatpush1.msra.mxu0 0.0
    %286 = vmatprep.subr.mxu0 0.0
    %287 = vmatpush1.msra.mxu0 0.0
    %288 = vmatprep.subr.mxu0 0.0
    %289 = vmatpush1.msra.mxu0 0.0
    %290 = vmatprep.subr.mxu0 0.0
    %291 = vmatpush1.msra.mxu0 0.0
    %292 = vmatprep.subr.mxu0 0.0
    %293 = vmatpush1.msra.mxu0 0.0
    %294 = vmatprep.subr.mxu0 0.0
    %295 = vmatpush1.msra.mxu0 0.0
    %296 = vmatprep.subr.mxu0 0.0
    %297 = vmatpush1.msra.mxu0 0.0
    %298 = vmatprep.subr.mxu0 0.0
    %299 = vmatpush1.msra.mxu0 0.0
    %300 = vmatprep.subr.mxu0 0.0
    %301 = vmatpush1.msra.mxu0 0.0
    %302 = vmatprep.subr.mxu0 0.0
    %303 = vmatpush1.msra.mxu0 0.0
    %304 = vmatprep.subr.mxu0 0.0
    %305 = vmatpush1.msra.mxu0 0.0
    %306 = vmatprep.subr.mxu0 0.0
    %307 = vmatpush1.msra.mxu0 0.0
    %308 = vmatprep.subr.mxu0 0.0
    %309 = vmatpush1.msra.mxu0 0.0
    %310 = vmatprep.subr.mxu0 0.0
    %311 = vmatpush1.msra.mxu0 0.0
    %312 = vmatprep.subr.mxu0 0.0
    %313 = vmatpush1.msra.mxu0 0.0
    %314 = vmatprep.subr.mxu0 0.0
    %315 = vmatpush1.msra.mxu0 0.0
    %316 = vmatprep.subr.mxu0 0.0
    %317 = vmatpush1.msra.mxu0 0.0
    %318 = vmatprep.subr.mxu0 0.0
    %319 = vmatpush1.msra.mxu0 0.0
    %320 = vmatprep.subr.mxu0 0.0
    %321 = vmatpush1.msra.mxu0 0.0
    %322 = vmatprep.subr.mxu0 0.0
    %323 = vmatpush1.msra.mxu0 0.0
    %324 = vmatprep.subr.mxu0 0.0
    %325 = vmatpush1.msra.mxu0 0.0
    %326 = vmatprep.mubr.f32.mxu0 0.0
    %327 = vmatmul.mubr.f32.gmra.mrb[0].mxu0 %v260
    %v328 = vpop.f32.mrb[0].mxu0
    %v329 = vadd.f32 0.0, %v328
    %v330 = vpop.f32.mrb[0].mxu0
    %v331 = vadd.f32 0.0, %v330
    %332 = vdwg.mxu0
    %v335 = vcombine.low %v329, %v331
    %v337 = vunpack.c.l.s4 1983009808
    %v338 = vunpack.c.0.s8 %v337
    %v339 = vlaneseq
    %v340 = vshrl.u32 %v339, 7
    %v341 = vsub.s32 %v338, %v340
    %v342 = vrot.slane %v335, %v341
    %v344 = vmul.f32 %v35, %v342
    %345 = vst [vmem:[#allocation5] sm:$0xf] %v344
    // Predicated region
    $region26: #{tpu_custom_call.1} parent=1 // pred_check
      _
    $region27: #{tpu_custom_call.1} parent=1 // pred_check_branch
      %347 = sbr.rel (0) target = $region29
    $region28: #{tpu_custom_call.1} parent=1 // pred_region
      %s349 = ssub.s32 64, 64
      %350 = vsyncadd [#allocation4], %s349
      %s352 = sshll.u32 [#allocation5], 4
      %s353 = int_to_ptr.vmem [resolvable:$true] %s352
      %355 = dma.vmem_to_hbm [thread:$0]  %s353, 64, %s5, [#allocation4]
    $region29: #{tpu_custom_call.1} parent=1 // pred_fallthru
      _
    // Predicated region
    $region30: #{tpu_custom_call.1} parent=1 // pred_check
      _
    $region31: #{tpu_custom_call.1} parent=1 // pred_check_branch
      %357 = sbr.rel (0) target = $region33
    $region32: #{tpu_custom_call.1} parent=1 // pred_region
      %358 = dma.done [#allocation4], 64
    $region33: #{tpu_custom_call.1} parent=1 // pred_fallthru
      _
    %359 = vsyncpa [#allocation3], 1
    %360 = vsyncpa [#allocation4], 1

</llo_original>
